<compile_context>
chip_gen: v5e
topology: v5e:2x2
jax: 0.10.0
libtpu: 0.0.40
codegen_flags: <defaults>
</compile_context>

<pallas_src>
import jax
import jax.numpy as jnp
from jax.experimental import pallas as pl
from jax.experimental.pallas import tpu as pltpu

IN_FEATS = 320
H1, H2, H3, OUT = 128, 64, 32, 10
PAD = 128                 # hidden dims padded to 128 (exact through ReLU)
DEFAULT_TILE_B = 1024     # rows per grid step for large batches


def siamese_kernel(x1_ref, x2_ref,
                   w1_ref, b1_ref, w2_ref, b2_ref,
                   w3_ref, b3_ref, w4_ref, b4_ref,
                   o1_ref, o2_ref):
    """Run one batch tile of each branch through the shared (padded) MLP."""
    def mlp(x):
        h = jnp.maximum(
            jnp.dot(x, w1_ref[...], preferred_element_type=jnp.float32)
            + b1_ref[...], 0.0)
        h = jnp.maximum(
            jnp.dot(h, w2_ref[...], preferred_element_type=jnp.float32)
            + b2_ref[...], 0.0)
        h = jnp.maximum(
            jnp.dot(h, w3_ref[...], preferred_element_type=jnp.float32)
            + b3_ref[...], 0.0)
        return (jnp.dot(h, w4_ref[...], preferred_element_type=jnp.float32)
                + b4_ref[...])

    o1_ref[...] = mlp(x1_ref[...])
    o2_ref[...] = mlp(x2_ref[...])


def pad_params(params):
    """Zero-pad hidden dims to 128 (exact through ReLU). Input K=320 and
    output N=10 stay unpadded."""
    def pad2(w, rows, cols):
        r, c = w.shape
        return jnp.pad(w, ((0, rows - r), (0, cols - c)))

    return {
        "w1": params["w1"],                       # (320, 128)
        "b1": params["b1"],                       # (1, 128)
        "w2": pad2(params["w2"], PAD, PAD),       # (128, 64)  -> (128, 128)
        "b2": pad2(params["b2"], 1, PAD),         # (1, 64)    -> (1, 128)
        "w3": pad2(params["w3"], PAD, PAD),       # (64, 32)   -> (128, 128)
        "b3": pad2(params["b3"], 1, PAD),         # (1, 32)    -> (1, 128)
        "w4": pad2(params["w4"], PAD, OUT),       # (32, 10)   -> (128, 10)
        "b4": params["b4"],                       # (1, 10)
    }


def _pick_tile(batch, cap=DEFAULT_TILE_B):
    """Batch-tile rows: multiple of 8, capped at `cap`, and (when the batch is
    big enough) split into >= 2 grid steps so v7x's two TensorCores both run."""
    if batch <= 8:
        return batch                      # single block == full array dim (legal)
    half = -(-batch // 2)                 # ceil(batch / 2)
    tile = ((half + 7) // 8) * 8          # round up to a multiple of 8
    return min(max(tile, 8), cap)


def siamese_forward(x1, x2, padded_params, tile_b=DEFAULT_TILE_B):
    """x1, x2: (B, 320) float32. Returns (o1, o2), each (B, 10) float32."""
    B = x1.shape[0]
    tile = _pick_tile(B, tile_b)
    grid = (pl.cdiv(B, tile),)

    p = padded_params
    const = lambda i: (0, 0)  # weights/biases stay VMEM-resident across steps
    row = lambda i: (i, 0)

    o1, o2 = pl.pallas_call(
        siamese_kernel,
        out_shape=(jax.ShapeDtypeStruct((B, OUT), jnp.float32),
                   jax.ShapeDtypeStruct((B, OUT), jnp.float32)),
        grid=grid,
        in_specs=[
            pl.BlockSpec((tile, IN_FEATS), row),   # x1 tile (K=320, unpadded)
            pl.BlockSpec((tile, IN_FEATS), row),   # x2 tile
            pl.BlockSpec((IN_FEATS, PAD), const),  # w1 (320, 128)
            pl.BlockSpec((1, PAD), const),         # b1
            pl.BlockSpec((PAD, PAD), const),       # w2 (padded to 128x128)
            pl.BlockSpec((1, PAD), const),         # b2
            pl.BlockSpec((PAD, PAD), const),       # w3
            pl.BlockSpec((1, PAD), const),         # b3
            pl.BlockSpec((PAD, OUT), const),       # w4 (128, 10)
            pl.BlockSpec((1, OUT), const),         # b4
        ],
        out_specs=(
            pl.BlockSpec((tile, OUT), row),        # o1: direct (B, 10) writes
            pl.BlockSpec((tile, OUT), row),        # o2
        ),
        compiler_params=pltpu.CompilerParams(
            dimension_semantics=("parallel",),     # megacore sharding on v7x
            vmem_limit_bytes=32 * 1024 * 1024,     # v5e scoped default is 16 MiB
        ),
    )(x1, x2, p["w1"], p["b1"], p["w2"], p["b2"], p["w3"], p["b3"],
      p["w4"], p["b4"])

    return o1, o2


def init_params(key):
    """Deterministic init matching PyTorch Linear default U(-1/sqrt(fan_in), .)."""
    dims = [(IN_FEATS, H1), (H1, H2), (H2, H3), (H3, OUT)]
    params = {}
    for i, (fan_in, fan_out) in enumerate(dims, start=1):
        key, kw, kb = jax.random.split(key, 3)
        bound = 1.0 / (fan_in ** 0.5)
        params[f"w{i}"] = jax.random.uniform(
            kw, (fan_in, fan_out), jnp.float32, -bound, bound)
        params[f"b{i}"] = jax.random.uniform(
            kb, (1, fan_out), jnp.float32, -bound, bound)
    return params


def reference_forward(x1, x2, p):
    def mlp(x):
        h = jnp.maximum(x @ p["w1"] + p["b1"], 0.0)
        h = jnp.maximum(h @ p["w2"] + p["b2"], 0.0)
        h = jnp.maximum(h @ p["w3"] + p["b3"], 0.0)
        return h @ p["w4"] + p["b4"]
    return mlp(x1), mlp(x2)


if __name__ == "__main__":
    key = jax.random.PRNGKey(0)
    kp, k1, k2 = jax.random.split(key, 3)
    params = init_params(kp)
    padded = pad_params(params)

    # Small batch (single partial block).
    B = 2
    x1 = jax.random.normal(k1, (B, IN_FEATS), jnp.float32)
    x2 = jax.random.normal(k2, (B, IN_FEATS), jnp.float32)

    o1, o2 = siamese_forward(x1, x2, padded)
    jax.block_until_ready((o1, o2))

    r1, r2 = reference_forward(x1, x2, params)
    assert o1.shape == (B, OUT) and o2.shape == (B, OUT)
    assert jnp.allclose(o1, r1, atol=1e-4, rtol=1e-4)
    assert jnp.allclose(o2, r2, atol=1e-4, rtol=1e-4)

    # Non-tile-aligned batch exercising multiple grid steps + boundary block.
    kb1, kb2 = jax.random.split(jax.random.PRNGKey(1))
    Bb = 20
    xb1 = jax.random.normal(kb1, (Bb, IN_FEATS), jnp.float32)
    xb2 = jax.random.normal(kb2, (Bb, IN_FEATS), jnp.float32)
    ob1, ob2 = siamese_forward(xb1, xb2, padded)
    jax.block_until_ready((ob1, ob2))
    rb1, rb2 = reference_forward(xb1, xb2, params)
    assert ob1.shape == (Bb, OUT) and ob2.shape == (Bb, OUT)
    assert jnp.allclose(ob1, rb1, atol=1e-4, rtol=1e-4)
    assert jnp.allclose(ob2, rb2, atol=1e-4, rtol=1e-4)

    print("KERNEL_OK")
</pallas_src>

<mosaic_0001>
module attributes {stable_mosaic.version = 11 : i64} {
  func.func @siamese_kernel(%arg0: i32, %arg1: memref<2x320xf32, #tpu.memory_space<vmem>>, %arg2: memref<2x320xf32, #tpu.memory_space<vmem>>, %arg3: memref<320x128xf32, #tpu.memory_space<vmem>>, %arg4: memref<1x128xf32, #tpu.memory_space<vmem>>, %arg5: memref<128x128xf32, #tpu.memory_space<vmem>>, %arg6: memref<1x128xf32, #tpu.memory_space<vmem>>, %arg7: memref<128x128xf32, #tpu.memory_space<vmem>>, %arg8: memref<1x128xf32, #tpu.memory_space<vmem>>, %arg9: memref<128x10xf32, #tpu.memory_space<vmem>>, %arg10: memref<1x10xf32, #tpu.memory_space<vmem>>, %arg11: memref<2x10xf32, #tpu.memory_space<vmem>>, %arg12: memref<2x10xf32, #tpu.memory_space<vmem>>) attributes {dimension_semantics = [#tpu.dimension_semantics<parallel>], iteration_bounds = array<i64: 1>, scalar_prefetch = 0 : i64, scratch_operands = 0 : i64, tpu.core_type = #tpu.core_type<tc>, window_params = [{transform_indices = @transform_0, window_bounds = array<i64: 2, 320>}, {transform_indices = @transform_1, window_bounds = array<i64: 2, 320>}, {pipeline_mode = #tpu.pipeline_mode<synchronous>, transform_indices = @transform_2, window_bounds = array<i64: 320, 128>}, {pipeline_mode = #tpu.pipeline_mode<synchronous>, transform_indices = @transform_3, window_bounds = array<i64: 1, 128>}, {pipeline_mode = #tpu.pipeline_mode<synchronous>, transform_indices = @transform_4, window_bounds = array<i64: 128, 128>}, {pipeline_mode = #tpu.pipeline_mode<synchronous>, transform_indices = @transform_5, window_bounds = array<i64: 1, 128>}, {pipeline_mode = #tpu.pipeline_mode<synchronous>, transform_indices = @transform_6, window_bounds = array<i64: 128, 128>}, {pipeline_mode = #tpu.pipeline_mode<synchronous>, transform_indices = @transform_7, window_bounds = array<i64: 1, 128>}, {pipeline_mode = #tpu.pipeline_mode<synchronous>, transform_indices = @transform_8, window_bounds = array<i64: 128, 10>}, {pipeline_mode = #tpu.pipeline_mode<synchronous>, transform_indices = @transform_9, window_bounds = array<i64: 1, 10>}, {transform_indices = @transform_10, window_bounds = array<i64: 2, 10>}, {transform_indices = @transform_11, window_bounds = array<i64: 2, 10>}]} {
    %c0 = arith.constant 0 : index
    %c0_0 = arith.constant 0 : index
    %0 = vector.load %arg1[%c0, %c0_0] : memref<2x320xf32, #tpu.memory_space<vmem>>, vector<2x320xf32>
    %c0_1 = arith.constant 0 : index
    %c0_2 = arith.constant 0 : index
    %1 = vector.load %arg3[%c0_1, %c0_2] : memref<320x128xf32, #tpu.memory_space<vmem>>, vector<320x128xf32>
    %cst = arith.constant dense<0.000000e+00> : vector<2x128xf32>
    %2 = tpu.matmul %0, %1, %cst {dimension_numbers = #tpu.dot_dimension_numbers<[1], [0], [0], [1], [0, 0, 1, 1], [], []>} : vector<2x320xf32>, vector<320x128xf32>, vector<2x128xf32> -> vector<2x128xf32>
    %c0_3 = arith.constant 0 : index
    %c0_4 = arith.constant 0 : index
    %3 = vector.load %arg4[%c0_3, %c0_4] : memref<1x128xf32, #tpu.memory_space<vmem>>, vector<1x128xf32>
    %4 = vector.broadcast %3 : vector<1x128xf32> to vector<2x128xf32>
    %5 = arith.addf %2, %4 : vector<2x128xf32>
    %cst_5 = arith.constant 0.000000e+00 : f32
    %6 = vector.broadcast %cst_5 : f32 to vector<2x128xf32>
    %7 = arith.maximumf %5, %6 : vector<2x128xf32>
    %c0_6 = arith.constant 0 : index
    %c0_7 = arith.constant 0 : index
    %8 = vector.load %arg5[%c0_6, %c0_7] : memref<128x128xf32, #tpu.memory_space<vmem>>, vector<128x128xf32>
    %cst_8 = arith.constant dense<0.000000e+00> : vector<2x128xf32>
    %9 = tpu.matmul %7, %8, %cst_8 {dimension_numbers = #tpu.dot_dimension_numbers<[1], [0], [0], [1], [0, 0, 1, 1], [], []>} : vector<2x128xf32>, vector<128x128xf32>, vector<2x128xf32> -> vector<2x128xf32>
    %c0_9 = arith.constant 0 : index
    %c0_10 = arith.constant 0 : index
    %10 = vector.load %arg6[%c0_9, %c0_10] : memref<1x128xf32, #tpu.memory_space<vmem>>, vector<1x128xf32>
    %11 = vector.broadcast %10 : vector<1x128xf32> to vector<2x128xf32>
    %12 = arith.addf %9, %11 : vector<2x128xf32>
    %cst_11 = arith.constant 0.000000e+00 : f32
    %13 = vector.broadcast %cst_11 : f32 to vector<2x128xf32>
    %14 = arith.maximumf %12, %13 : vector<2x128xf32>
    %c0_12 = arith.constant 0 : index
    %c0_13 = arith.constant 0 : index
    %15 = vector.load %arg7[%c0_12, %c0_13] : memref<128x128xf32, #tpu.memory_space<vmem>>, vector<128x128xf32>
    %cst_14 = arith.constant dense<0.000000e+00> : vector<2x128xf32>
    %16 = tpu.matmul %14, %15, %cst_14 {dimension_numbers = #tpu.dot_dimension_numbers<[1], [0], [0], [1], [0, 0, 1, 1], [], []>} : vector<2x128xf32>, vector<128x128xf32>, vector<2x128xf32> -> vector<2x128xf32>
    %c0_15 = arith.constant 0 : index
    %c0_16 = arith.constant 0 : index
    %17 = vector.load %arg8[%c0_15, %c0_16] : memref<1x128xf32, #tpu.memory_space<vmem>>, vector<1x128xf32>
    %18 = vector.broadcast %17 : vector<1x128xf32> to vector<2x128xf32>
    %19 = arith.addf %16, %18 : vector<2x128xf32>
    %cst_17 = arith.constant 0.000000e+00 : f32
    %20 = vector.broadcast %cst_17 : f32 to vector<2x128xf32>
    %21 = arith.maximumf %19, %20 : vector<2x128xf32>
    %c0_18 = arith.constant 0 : index
    %c0_19 = arith.constant 0 : index
    %22 = vector.load %arg9[%c0_18, %c0_19] : memref<128x10xf32, #tpu.memory_space<vmem>>, vector<128x10xf32>
    %cst_20 = arith.constant dense<0.000000e+00> : vector<2x10xf32>
    %23 = tpu.matmul %21, %22, %cst_20 {dimension_numbers = #tpu.dot_dimension_numbers<[1], [0], [0], [1], [0, 0, 1, 1], [], []>} : vector<2x128xf32>, vector<128x10xf32>, vector<2x10xf32> -> vector<2x10xf32>
    %c0_21 = arith.constant 0 : index
    %c0_22 = arith.constant 0 : index
    %24 = vector.load %arg10[%c0_21, %c0_22] : memref<1x10xf32, #tpu.memory_space<vmem>>, vector<1x10xf32>
    %25 = vector.broadcast %24 : vector<1x10xf32> to vector<2x10xf32>
    %26 = arith.addf %23, %25 : vector<2x10xf32>
    %c0_23 = arith.constant 0 : index
    %c0_24 = arith.constant 0 : index
    %27 = vector.load %arg11[%c0_23, %c0_24] : memref<2x10xf32, #tpu.memory_space<vmem>>, vector<2x10xf32>
    tpu.vector_store %arg11[%c0_23, %c0_24], %26 {strides = array<i32>} : memref<2x10xf32, #tpu.memory_space<vmem>>, vector<2x10xf32>,
    %c0_25 = arith.constant 0 : index
    %c0_26 = arith.constant 0 : index
    %28 = vector.load %arg2[%c0_25, %c0_26] : memref<2x320xf32, #tpu.memory_space<vmem>>, vector<2x320xf32>
    %c0_27 = arith.constant 0 : index
    %c0_28 = arith.constant 0 : index
    %29 = vector.load %arg3[%c0_27, %c0_28] : memref<320x128xf32, #tpu.memory_space<vmem>>, vector<320x128xf32>
    %cst_29 = arith.constant dense<0.000000e+00> : vector<2x128xf32>
    %30 = tpu.matmul %28, %29, %cst_29 {dimension_numbers = #tpu.dot_dimension_numbers<[1], [0], [0], [1], [0, 0, 1, 1], [], []>} : vector<2x320xf32>, vector<320x128xf32>, vector<2x128xf32> -> vector<2x128xf32>
    %c0_30 = arith.constant 0 : index
    %c0_31 = arith.constant 0 : index
    %31 = vector.load %arg4[%c0_30, %c0_31] : memref<1x128xf32, #tpu.memory_space<vmem>>, vector<1x128xf32>
    %32 = vector.broadcast %31 : vector<1x128xf32> to vector<2x128xf32>
    %33 = arith.addf %30, %32 : vector<2x128xf32>
    %cst_32 = arith.constant 0.000000e+00 : f32
    %34 = vector.broadcast %cst_32 : f32 to vector<2x128xf32>
    %35 = arith.maximumf %33, %34 : vector<2x128xf32>
    %c0_33 = arith.constant 0 : index
    %c0_34 = arith.constant 0 : index
    %36 = vector.load %arg5[%c0_33, %c0_34] : memref<128x128xf32, #tpu.memory_space<vmem>>, vector<128x128xf32>
    %cst_35 = arith.constant dense<0.000000e+00> : vector<2x128xf32>
    %37 = tpu.matmul %35, %36, %cst_35 {dimension_numbers = #tpu.dot_dimension_numbers<[1], [0], [0], [1], [0, 0, 1, 1], [], []>} : vector<2x128xf32>, vector<128x128xf32>, vector<2x128xf32> -> vector<2x128xf32>
    %c0_36 = arith.constant 0 : index
    %c0_37 = arith.constant 0 : index
    %38 = vector.load %arg6[%c0_36, %c0_37] : memref<1x128xf32, #tpu.memory_space<vmem>>, vector<1x128xf32>
    %39 = vector.broadcast %38 : vector<1x128xf32> to vector<2x128xf32>
    %40 = arith.addf %37, %39 : vector<2x128xf32>
    %cst_38 = arith.constant 0.000000e+00 : f32
    %41 = vector.broadcast %cst_38 : f32 to vector<2x128xf32>
    %42 = arith.maximumf %40, %41 : vector<2x128xf32>
    %c0_39 = arith.constant 0 : index
    %c0_40 = arith.constant 0 : index
    %43 = vector.load %arg7[%c0_39, %c0_40] : memref<128x128xf32, #tpu.memory_space<vmem>>, vector<128x128xf32>
    %cst_41 = arith.constant dense<0.000000e+00> : vector<2x128xf32>
    %44 = tpu.matmul %42, %43, %cst_41 {dimension_numbers = #tpu.dot_dimension_numbers<[1], [0], [0], [1], [0, 0, 1, 1], [], []>} : vector<2x128xf32>, vector<128x128xf32>, vector<2x128xf32> -> vector<2x128xf32>
    %c0_42 = arith.constant 0 : index
    %c0_43 = arith.constant 0 : index
    %45 = vector.load %arg8[%c0_42, %c0_43] : memref<1x128xf32, #tpu.memory_space<vmem>>, vector<1x128xf32>
    %46 = vector.broadcast %45 : vector<1x128xf32> to vector<2x128xf32>
    %47 = arith.addf %44, %46 : vector<2x128xf32>
    %cst_44 = arith.constant 0.000000e+00 : f32
    %48 = vector.broadcast %cst_44 : f32 to vector<2x128xf32>
    %49 = arith.maximumf %47, %48 : vector<2x128xf32>
    %c0_45 = arith.constant 0 : index
    %c0_46 = arith.constant 0 : index
    %50 = vector.load %arg9[%c0_45, %c0_46] : memref<128x10xf32, #tpu.memory_space<vmem>>, vector<128x10xf32>
    %cst_47 = arith.constant dense<0.000000e+00> : vector<2x10xf32>
    %51 = tpu.matmul %49, %50, %cst_47 {dimension_numbers = #tpu.dot_dimension_numbers<[1], [0], [0], [1], [0, 0, 1, 1], [], []>} : vector<2x128xf32>, vector<128x10xf32>, vector<2x10xf32> -> vector<2x10xf32>
    %c0_48 = arith.constant 0 : index
    %c0_49 = arith.constant 0 : index
    %52 = vector.load %arg10[%c0_48, %c0_49] : memref<1x10xf32, #tpu.memory_space<vmem>>, vector<1x10xf32>
    %53 = vector.broadcast %52 : vector<1x10xf32> to vector<2x10xf32>
    %54 = arith.addf %51, %53 : vector<2x10xf32>
    %c0_50 = arith.constant 0 : index
    %c0_51 = arith.constant 0 : index
    %55 = vector.load %arg12[%c0_50, %c0_51] : memref<2x10xf32, #tpu.memory_space<vmem>>, vector<2x10xf32>
    tpu.vector_store %arg12[%c0_50, %c0_51], %54 {strides = array<i32>} : memref<2x10xf32, #tpu.memory_space<vmem>>, vector<2x10xf32>,
    return
  }
  func.func @transform_0(%arg0: i32) -> (i32, i32) {
    %c0_i32 = arith.constant 0 : i32
    %c0_i32_0 = arith.constant 0 : i32
    return %arg0, %c0_i32 : i32, i32
  }
  func.func @transform_1(%arg0: i32) -> (i32, i32) {
    %c0_i32 = arith.constant 0 : i32
    %c0_i32_0 = arith.constant 0 : i32
    return %arg0, %c0_i32 : i32, i32
  }
  func.func @transform_2(%arg0: i32) -> (i32, i32) {
    %c0_i32 = arith.constant 0 : i32
    %c0_i32_0 = arith.constant 0 : i32
    %c0_i32_1 = arith.constant 0 : i32
    return %c0_i32, %c0_i32_0 : i32, i32
  }
  func.func @transform_3(%arg0: i32) -> (i32, i32) {
    %c0_i32 = arith.constant 0 : i32
    %c0_i32_0 = arith.constant 0 : i32
    %c0_i32_1 = arith.constant 0 : i32
    return %c0_i32, %c0_i32_0 : i32, i32
  }
  func.func @transform_4(%arg0: i32) -> (i32, i32) {
    %c0_i32 = arith.constant 0 : i32
    %c0_i32_0 = arith.constant 0 : i32
    %c0_i32_1 = arith.constant 0 : i32
    return %c0_i32, %c0_i32_0 : i32, i32
  }
  func.func @transform_5(%arg0: i32) -> (i32, i32) {
    %c0_i32 = arith.constant 0 : i32
    %c0_i32_0 = arith.constant 0 : i32
    %c0_i32_1 = arith.constant 0 : i32
    return %c0_i32, %c0_i32_0 : i32, i32
  }
  func.func @transform_6(%arg0: i32) -> (i32, i32) {
    %c0_i32 = arith.constant 0 : i32
    %c0_i32_0 = arith.constant 0 : i32
    %c0_i32_1 = arith.constant 0 : i32
    return %c0_i32, %c0_i32_0 : i32, i32
  }
  func.func @transform_7(%arg0: i32) -> (i32, i32) {
    %c0_i32 = arith.constant 0 : i32
    %c0_i32_0 = arith.constant 0 : i32
    %c0_i32_1 = arith.constant 0 : i32
    return %c0_i32, %c0_i32_0 : i32, i32
  }
  func.func @transform_8(%arg0: i32) -> (i32, i32) {
    %c0_i32 = arith.constant 0 : i32
    %c0_i32_0 = arith.constant 0 : i32
    %c0_i32_1 = arith.constant 0 : i32
    return %c0_i32, %c0_i32_0 : i32, i32
  }
  func.func @transform_9(%arg0: i32) -> (i32, i32) {
    %c0_i32 = arith.constant 0 : i32
    %c0_i32_0 = arith.constant 0 : i32
    %c0_i32_1 = arith.constant 0 : i32
    return %c0_i32, %c0_i32_0 : i32, i32
  }
  func.func @transform_10(%arg0: i32) -> (i32, i32) {
    %c0_i32 = arith.constant 0 : i32
    %c0_i32_0 = arith.constant 0 : i32
    return %arg0, %c0_i32 : i32, i32
  }
  func.func @transform_11(%arg0: i32) -> (i32, i32) {
    %c0_i32 = arith.constant 0 : i32
    %c0_i32_0 = arith.constant 0 : i32
    return %arg0, %c0_i32 : i32, i32
  }
}

</mosaic_0001>

<llo_original>
// kernel: tpu_custom_call.1
$region0: #{tpu_custom_call.1}
  #allocation0 [shape = 'u32[]', space=smem, size = 0x4, offset = 0x4, fixed_abs, tag = 'smem constant byte address 0x4 - core index']
  #allocation1 [shape = 'u32[72,128]{1,0:T(1,128)}', space=vmem, size = 0x9000, scoped, tag = 'internal scratch']
  %s0 = inlined_call_operand.vmem [shape: f32[2,320], index: 0, kind: input, shape index: {}]
  %s1 = inlined_call_operand.vmem [shape: f32[2,320], index: 1, kind: input, shape index: {}]
  %s2 = inlined_call_operand.hbm [shape: f32[320,128], index: 2, kind: input, shape index: {}]
  %s3 = inlined_call_operand.vmem [shape: f32[1,128], index: 3, kind: input, shape index: {}]
  %s4 = inlined_call_operand.vmem [shape: f32[128,128], index: 4, kind: input, shape index: {}]
  %s5 = inlined_call_operand.vmem [shape: f32[1,128], index: 5, kind: input, shape index: {}]
  %s6 = inlined_call_operand.hbm [shape: f32[128,128], index: 6, kind: input, shape index: {}]
  %s7 = inlined_call_operand.vmem [shape: f32[1,128], index: 7, kind: input, shape index: {}]
  %s8 = inlined_call_operand.vmem [shape: f32[128,10], index: 8, kind: input, shape index: {}]
  %s9 = inlined_call_operand.vmem [shape: f32[1,10], index: 9, kind: input, shape index: {}]
  %s10 = inlined_call_operand.hbm [shape: f32[2,10], index: 10, kind: output, shape index: {0}]
  %s11 = inlined_call_operand.hbm [shape: f32[2,10], index: 11, kind: output, shape index: {1}]
  %12 = xla_tuple %s10, %s11
  %s13 = sld [smem:[#allocation0]]
  $region66: #{tpu_custom_call.1} parent=0
    _
  %s15 = ssub.s32 1, %s13
  %s16 = scalar_select 0, %s15, %s13
  $region1: #{tpu_custom_call.1} parent=0
    #allocation2 [shape = 'u8[163840]{0}', space=vmem, size = 0x28000, scoped, tag = 'input window, operand 2, single buffered']
    #allocation3 [shape = 's32[1]{0}', space=sflag, size = 0x4, scoped, tag = 'scoped memory for tpu_custom_call.1']
    #allocation4 [shape = 's32[1]{0}', space=sflag, size = 0x4, scoped, tag = 'scoped memory for tpu_custom_call.1']
    #allocation5 [shape = 'u8[65536]{0}', space=vmem, size = 0x10000, scoped, tag = 'input window, operand 6, single buffered']
    #allocation6 [shape = 's32[1]{0}', space=sflag, size = 0x4, scoped, tag = 'scoped memory for tpu_custom_call.1']
    #allocation7 [shape = 'u8[1024]{0}', space=vmem, size = 0x400, scoped, tag = 'output window, operand 0, single buffered']
    #allocation8 [shape = 'u8[1024]{0}', space=vmem, size = 0x400, scoped, tag = 'output window, operand 1, single buffered']
    #allocation9 [shape = 's32[1]{0}', space=sflag, size = 0x4, scoped, tag = 'scoped memory for tpu_custom_call.1']
    %17 = vsyncpa [#allocation3], 0
    %18 = vsyncpa [#allocation6], 0
    %19 = vsyncpa [#allocation4], 0
    %20 = vsyncpa [#allocation9], 0
    // Predicated region
    $region2: #{tpu_custom_call.1} parent=1 // pred_check
      _
    $region3: #{tpu_custom_call.1} parent=1 // pred_check_branch
      %22 = sbr.rel (0) target = $region5
    $region4: #{tpu_custom_call.1} parent=1 // pred_region
      _
    $region5: #{tpu_custom_call.1} parent=1 // pred_fallthru
      _
    // Predicated region
    $region6: #{tpu_custom_call.1} parent=1 // pred_check
      _
    $region7: #{tpu_custom_call.1} parent=1 // pred_check_branch
      %24 = sbr.rel (0) target = $region9
    $region8: #{tpu_custom_call.1} parent=1 // pred_region
      _
    $region9: #{tpu_custom_call.1} parent=1 // pred_fallthru
      _
    // Predicated region
    $region10: #{tpu_custom_call.1} parent=1 // pred_check
      _
    $region11: #{tpu_custom_call.1} parent=1 // pred_check_branch
      %26 = sbr.rel (0) target = $region13
    $region12: #{tpu_custom_call.1} parent=1 // pred_region
      %28 = vsyncadd [#allocation3], 0
      %s29 = sshll.u32 %s2, 4
      %s30 = int_to_ptr.hbm [resolvable:$true] %s29
      %s31 = sshll.u32 [#allocation2], 4
      %s32 = int_to_ptr.vmem [resolvable:$true] %s31
      %37 = dma.hbm_to_vmem [thread:$0]  %s30, 5120, %s32, [#allocation3], 128, 128, 8
    $region13: #{tpu_custom_call.1} parent=1 // pred_fallthru
      _
    // Predicated region
    $region14: #{tpu_custom_call.1} parent=1 // pred_check
      _
    $region15: #{tpu_custom_call.1} parent=1 // pred_check_branch
      %39 = sbr.rel (0) target = $region17
    $region16: #{tpu_custom_call.1} parent=1 // pred_region
      _
    $region17: #{tpu_custom_call.1} parent=1 // pred_fallthru
      _
    // Predicated region
    $region18: #{tpu_custom_call.1} parent=1 // pred_check
      _
    $region19: #{tpu_custom_call.1} parent=1 // pred_check_branch
      %41 = sbr.rel (0) target = $region21
    $region20: #{tpu_custom_call.1} parent=1 // pred_region
      _
    $region21: #{tpu_custom_call.1} parent=1 // pred_fallthru
      _
    // Predicated region
    $region22: #{tpu_custom_call.1} parent=1 // pred_check
      _
    $region23: #{tpu_custom_call.1} parent=1 // pred_check_branch
      %43 = sbr.rel (0) target = $region25
    $region24: #{tpu_custom_call.1} parent=1 // pred_region
      _
    $region25: #{tpu_custom_call.1} parent=1 // pred_fallthru
      _
    // Predicated region
    $region26: #{tpu_custom_call.1} parent=1 // pred_check
      _
    $region27: #{tpu_custom_call.1} parent=1 // pred_check_branch
      %45 = sbr.rel (0) target = $region29
    $region28: #{tpu_custom_call.1} parent=1 // pred_region
      %47 = vsyncadd [#allocation6], 0
      %s48 = sshll.u32 %s6, 4
      %s49 = int_to_ptr.hbm [resolvable:$true] %s48
      %s50 = sshll.u32 [#allocation5], 4
      %s51 = int_to_ptr.vmem [resolvable:$true] %s50
      %56 = dma.hbm_to_vmem [thread:$0]  %s49, 2048, %s51, [#allocation6], 128, 128, 8
    $region29: #{tpu_custom_call.1} parent=1 // pred_fallthru
      _
    // Predicated region
    $region30: #{tpu_custom_call.1} parent=1 // pred_check
      _
    $region31: #{tpu_custom_call.1} parent=1 // pred_check_branch
      %58 = sbr.rel (0) target = $region33
    $region32: #{tpu_custom_call.1} parent=1 // pred_region
      _
    $region33: #{tpu_custom_call.1} parent=1 // pred_fallthru
      _
    // Predicated region
    $region34: #{tpu_custom_call.1} parent=1 // pred_check
      _
    $region35: #{tpu_custom_call.1} parent=1 // pred_check_branch
      %60 = sbr.rel (0) target = $region37
    $region36: #{tpu_custom_call.1} parent=1 // pred_region
      _
    $region37: #{tpu_custom_call.1} parent=1 // pred_fallthru
      _
    // Predicated region
    $region38: #{tpu_custom_call.1} parent=1 // pred_check
      _
    $region39: #{tpu_custom_call.1} parent=1 // pred_check_branch
      %62 = sbr.rel (0) target = $region41
    $region40: #{tpu_custom_call.1} parent=1 // pred_region
      _
    $region41: #{tpu_custom_call.1} parent=1 // pred_fallthru
      _
    // Predicated region
    $region42: #{tpu_custom_call.1} parent=1 // pred_check
      _
    $region43: #{tpu_custom_call.1} parent=1 // pred_check_branch
      %64 = sbr.rel (0) target = $region45
    $region44: #{tpu_custom_call.1} parent=1 // pred_region
      %66 = dma.done [#allocation3], 5120
    $region45: #{tpu_custom_call.1} parent=1 // pred_fallthru
      _
    // Predicated region
    $region46: #{tpu_custom_call.1} parent=1 // pred_check
      _
    $region47: #{tpu_custom_call.1} parent=1 // pred_check_branch
      %68 = sbr.rel (0) target = $region49
    $region48: #{tpu_custom_call.1} parent=1 // pred_region
      %70 = dma.done [#allocation6], 2048
    $region49: #{tpu_custom_call.1} parent=1 // pred_fallthru
      _
    %v71 = vld [vmem:[%s0] sm:$0x3f]
    %v72 = vld [vmem:[#allocation2] sm:$0xff]
    %v73 = vld [vmem:[#allocation2 + $0x8] sm:$0xff]
    %v74 = vld [vmem:[#allocation2 + $0x10] sm:$0xff]
    %v75 = vld [vmem:[#allocation2 + $0x18] sm:$0xff]
    %v76 = vld [vmem:[#allocation2 + $0x20] sm:$0xff]
    %v77 = vld [vmem:[#allocation2 + $0x28] sm:$0xff]
    %v78 = vld [vmem:[#allocation2 + $0x30] sm:$0xff]
    %v79 = vld [vmem:[#allocation2 + $0x38] sm:$0xff]
    %v80 = vld [vmem:[#allocation2 + $0x40] sm:$0xff]
    %v81 = vld [vmem:[#allocation2 + $0x48] sm:$0xff]
    %v82 = vld [vmem:[#allocation2 + $0x50] sm:$0xff]
    %v83 = vld [vmem:[#allocation2 + $0x58] sm:$0xff]
    %v84 = vld [vmem:[#allocation2 + $0x60] sm:$0xff]
    %v85 = vld [vmem:[#allocation2 + $0x68] sm:$0xff]
    %v86 = vld [vmem:[#allocation2 + $0x70] sm:$0xff]
    %v87 = vld [vmem:[#allocation2 + $0x78] sm:$0xff]
    %v88 = vld [vmem:[#allocation2 + $0x80] sm:$0xff]
    %v89 = vld [vmem:[#allocation2 + $0x88] sm:$0xff]
    %v90 = vld [vmem:[#allocation2 + $0x90] sm:$0xff]
    %v91 = vld [vmem:[#allocation2 + $0x98] sm:$0xff]
    %v92 = vld [vmem:[#allocation2 + $0xa0] sm:$0xff]
    %v93 = vld [vmem:[#allocation2 + $0xa8] sm:$0xff]
    %v94 = vld [vmem:[#allocation2 + $0xb0] sm:$0xff]
    %v95 = vld [vmem:[#allocation2 + $0xb8] sm:$0xff]
    %v96 = vld [vmem:[#allocation2 + $0xc0] sm:$0xff]
    %v97 = vld [vmem:[#allocation2 + $0xc8] sm:$0xff]
    %v98 = vld [vmem:[#allocation2 + $0xd0] sm:$0xff]
    %v99 = vld [vmem:[#allocation2 + $0xd8] sm:$0xff]
    %v100 = vld [vmem:[#allocation2 + $0xe0] sm:$0xff]
    %v101 = vld [vmem:[#allocation2 + $0xe8] sm:$0xff]
    %v102 = vld [vmem:[#allocation2 + $0xf0] sm:$0xff]
    %v103 = vld [vmem:[#allocation2 + $0xf8] sm:$0xff]
    %v104 = vld [vmem:[#allocation2 + $0x100] sm:$0xff]
    %v105 = vld [vmem:[#allocation2 + $0x108] sm:$0xff]
    %v106 = vld [vmem:[#allocation2 + $0x110] sm:$0xff]
    %v107 = vld [vmem:[#allocation2 + $0x118] sm:$0xff]
    %v108 = vld [vmem:[#allocation2 + $0x120] sm:$0xff]
    %v109 = vld [vmem:[#allocation2 + $0x128] sm:$0xff]
    %v110 = vld [vmem:[#allocation2 + $0x130] sm:$0xff]
    %v111 = vld [vmem:[#allocation2 + $0x138] sm:$0xff]
    %v112 = vld [vmem:[%s3] sm:$0x1]
    %v114 = vperm.slane %v112, 0
    %117 = vst [vmem:[#allocation1] ss:$4 sm:$0xff] %v71
    %v118 = vld.sshfl [vmem:[#allocation1] sm:$0xff pattern:$0x73625140]
    %v119 = vld.sshfl [vmem:[#allocation1 + $0x8] sm:$0xff pattern:$0x73625140]
    %v120 = vld.sshfl [vmem:[#allocation1 + $0x10] sm:$0xff pattern:$0x73625140]
    %vm123 = vcmask 523264
    %v124 = vsel %vm123, %v120, 0
    %126 = vmatpush.msra.mxu0 %v87
    %127 = vmatpush.msra.mxu0 %v86
    %128 = vmatpush.msra.mxu0 %v85
    %129 = vmatpush.msra.mxu0 %v84
    %130 = vmatpush.msra.mxu0 %v83
    %131 = vmatpush.msra.mxu0 %v82
    %132 = vmatpush.msra.mxu0 %v81
    %133 = vmatpush.msra.mxu0 %v80
    %134 = vmatpush.msra.mxu0 %v79
    %135 = vmatpush.msra.mxu0 %v78
    %136 = vmatpush.msra.mxu0 %v77
    %137 = vmatpush.msra.mxu0 %v76
    %138 = vmatpush.msra.mxu0 %v75
    %139 = vmatpush.msra.mxu0 %v74
    %140 = vmatpush.msra.mxu0 %v73
    %141 = vmatpush.msra.mxu0 %v72
    %142 = vmatmul.f32.gmra.mxu0 %v118
    %v143 = vpop.f32.mrf.mxu0
    %v144 = vadd.f32 %v114, %v143
    %145 = vdwg.mxu0
    %146 = vmatpush.msra.mxu0 %v103
    %147 = vmatpush.msra.mxu0 %v102
    %148 = vmatpush.msra.mxu0 %v101
    %149 = vmatpush.msra.mxu0 %v100
    %150 = vmatpush.msra.mxu0 %v99
    %151 = vmatpush.msra.mxu0 %v98
    %152 = vmatpush.msra.mxu0 %v97
    %153 = vmatpush.msra.mxu0 %v96
    %154 = vmatpush.msra.mxu0 %v95
    %155 = vmatpush.msra.mxu0 %v94
    %156 = vmatpush.msra.mxu0 %v93
    %157 = vmatpush.msra.mxu0 %v92
    %158 = vmatpush.msra.mxu0 %v91
    %159 = vmatpush.msra.mxu0 %v90
    %160 = vmatpush.msra.mxu0 %v89
    %161 = vmatpush.msra.mxu0 %v88
    %162 = vmatmul.f32.gmra.mxu0 %v119
    %v163 = vpop.f32.mrf.mxu0
    %v164 = vadd.f32 %v144, %v163
    %165 = vdwg.mxu0
    %166 = vmatpush.msra.mxu0 0.0
    %167 = vmatpush.msra.mxu0 0.0
    %168 = vmatpush.msra.mxu0 0.0
    %169 = vmatpush.msra.mxu0 0.0
    %170 = vmatpush.msra.mxu0 0.0
    %171 = vmatpush.msra.mxu0 0.0
    %172 = vmatpush.msra.mxu0 0.0
    %173 = vmatpush.msra.mxu0 0.0
    %174 = vmatpush.msra.mxu0 %v111
    %175 = vmatpush.msra.mxu0 %v110
    %176 = vmatpush.msra.mxu0 %v109
    %177 = vmatpush.msra.mxu0 %v108
    %178 = vmatpush.msra.mxu0 %v107
    %179 = vmatpush.msra.mxu0 %v106
    %180 = vmatpush.msra.mxu0 %v105
    %181 = vmatpush.msra.mxu0 %v104
    %182 = vmatmul.f32.gmra.mxu0 %v124
    %v183 = vpop.f32.mrf.mxu0
    %v184 = vadd.f32 %v164, %v183
    %185 = vdwg.mxu0
    %v186 = vmax.f32 %v184, 0.0
    %v187 = vld [vmem:[%s4] sm:$0xff]
    %v188 = vld [vmem:[%s4 + $0x8] sm:$0xff]
    %v189 = vld [vmem:[%s4 + $0x10] sm:$0xff]
    %v190 = vld [vmem:[%s4 + $0x18] sm:$0xff]
    %v191 = vld [vmem:[%s4 + $0x20] sm:$0xff]
    %v192 = vld [vmem:[%s4 + $0x28] sm:$0xff]
    %v193 = vld [vmem:[%s4 + $0x30] sm:$0xff]
    %v194 = vld [vmem:[%s4 + $0x38] sm:$0xff]
    %v195 = vld [vmem:[%s4 + $0x40] sm:$0xff]
    %v196 = vld [vmem:[%s4 + $0x48] sm:$0xff]
    %v197 = vld [vmem:[%s4 + $0x50] sm:$0xff]
    %v198 = vld [vmem:[%s4 + $0x58] sm:$0xff]
    %v199 = vld [vmem:[%s4 + $0x60] sm:$0xff]
    %v200 = vld [vmem:[%s4 + $0x68] sm:$0xff]
    %v201 = vld [vmem:[%s4 + $0x70] sm:$0xff]
    %v202 = vld [vmem:[%s4 + $0x78] sm:$0xff]
    %v203 = vld [vmem:[%s5] sm:$0x1]
    %v205 = vperm.slane %v203, 0
    %207 = vmatpush.msra.mxu0 %v202
    %208 = vmatpush.msra.mxu0 %v201
    %209 = vmatpush.msra.mxu0 %v200
    %210 = vmatpush.msra.mxu0 %v199
    %211 = vmatpush.msra.mxu0 %v198
    %212 = vmatpush.msra.mxu0 %v197
    %213 = vmatpush.msra.mxu0 %v196
    %214 = vmatpush.msra.mxu0 %v195
    %215 = vmatpush.msra.mxu0 %v194
    %216 = vmatpush.msra.mxu0 %v193
    %217 = vmatpush.msra.mxu0 %v192
    %218 = vmatpush.msra.mxu0 %v191
    %219 = vmatpush.msra.mxu0 %v190
    %220 = vmatpush.msra.mxu0 %v189
    %221 = vmatpush.msra.mxu0 %v188
    %222 = vmatpush.msra.mxu0 %v187
    %223 = vmatmul.f32.gmra.mxu0 %v186
    %v224 = vpop.f32.mrf.mxu0
    %v225 = vadd.f32 %v205, %v224
    %226 = vdwg.mxu0
    %v227 = vmax.f32 %v225, 0.0
    %v228 = vld [vmem:[#allocation5] sm:$0xff]
    %v229 = vld [vmem:[#allocation5 + $0x8] sm:$0xff]
    %v230 = vld [vmem:[#allocation5 + $0x10] sm:$0xff]
    %v231 = vld [vmem:[#allocation5 + $0x18] sm:$0xff]
    %v232 = vld [vmem:[#allocation5 + $0x20] sm:$0xff]
    %v233 = vld [vmem:[#allocation5 + $0x28] sm:$0xff]
    %v234 = vld [vmem:[#allocation5 + $0x30] sm:$0xff]
    %v235 = vld [vmem:[#allocation5 + $0x38] sm:$0xff]
    %v236 = vld [vmem:[#allocation5 + $0x40] sm:$0xff]
    %v237 = vld [vmem:[#allocation5 + $0x48] sm:$0xff]
    %v238 = vld [vmem:[#allocation5 + $0x50] sm:$0xff]
    %v239 = vld [vmem:[#allocation5 + $0x58] sm:$0xff]
    %v240 = vld [vmem:[#allocation5 + $0x60] sm:$0xff]
    %v241 = vld [vmem:[#allocation5 + $0x68] sm:$0xff]
    %v242 = vld [vmem:[#allocation5 + $0x70] sm:$0xff]
    %v243 = vld [vmem:[#allocation5 + $0x78] sm:$0xff]
    %v244 = vld [vmem:[%s7] sm:$0x1]
    %v246 = vperm.slane %v244, 0
    %248 = vmatpush.msra.mxu0 %v243
    %249 = vmatpush.msra.mxu0 %v242
    %250 = vmatpush.msra.mxu0 %v241
    %251 = vmatpush.msra.mxu0 %v240
    %252 = vmatpush.msra.mxu0 %v239
    %253 = vmatpush.msra.mxu0 %v238
    %254 = vmatpush.msra.mxu0 %v237
    %255 = vmatpush.msra.mxu0 %v236
    %256 = vmatpush.msra.mxu0 %v235
    %257 = vmatpush.msra.mxu0 %v234
    %258 = vmatpush.msra.mxu0 %v233
    %259 = vmatpush.msra.mxu0 %v232
    %260 = vmatpush.msra.mxu0 %v231
    %261 = vmatpush.msra.mxu0 %v230
    %262 = vmatpush.msra.mxu0 %v229
    %263 = vmatpush.msra.mxu0 %v228
    %264 = vmatmul.f32.gmra.mxu0 %v227
    %v265 = vpop.f32.mrf.mxu0
    %v266 = vadd.f32 %v246, %v265
    %267 = vdwg.mxu0
    %v268 = vmax.f32 %v266, 0.0
    %v269 = vld [vmem:[%s8] sm:$0xff]
    %v270 = vld [vmem:[%s8 + $0x8] sm:$0xff]
    %v271 = vld [vmem:[%s8 + $0x10] sm:$0xff]
    %v272 = vld [vmem:[%s8 + $0x18] sm:$0xff]
    %v273 = vld [vmem:[%s8 + $0x20] sm:$0xff]
    %v274 = vld [vmem:[%s8 + $0x28] sm:$0xff]
    %v275 = vld [vmem:[%s8 + $0x30] sm:$0xff]
    %v276 = vld [vmem:[%s8 + $0x38] sm:$0xff]
    %v277 = vld [vmem:[%s8 + $0x40] sm:$0xff]
    %v278 = vld [vmem:[%s8 + $0x48] sm:$0xff]
    %v279 = vld [vmem:[%s8 + $0x50] sm:$0xff]
    %v280 = vld [vmem:[%s8 + $0x58] sm:$0xff]
    %v281 = vld [vmem:[%s8 + $0x60] sm:$0xff]
    %v282 = vld [vmem:[%s8 + $0x68] sm:$0xff]
    %v283 = vld [vmem:[%s8 + $0x70] sm:$0xff]
    %v284 = vld [vmem:[%s8 + $0x78] sm:$0xff]
    %v285 = vld [vmem:[%s9] sm:$0x1]
    %v287 = vperm.slane %v285, 0
    %289 = vmatpush.msra.mxu0 %v284
    %290 = vmatpush.msra.mxu0 %v283
    %291 = vmatpush.msra.mxu0 %v282
    %292 = vmatpush.msra.mxu0 %v281
    %293 = vmatpush.msra.mxu0 %v280
    %294 = vmatpush.msra.mxu0 %v279
    %295 = vmatpush.msra.mxu0 %v278
    %296 = vmatpush.msra.mxu0 %v277
    %297 = vmatpush.msra.mxu0 %v276
    %298 = vmatpush.msra.mxu0 %v275
    %299 = vmatpush.msra.mxu0 %v274
    %300 = vmatpush.msra.mxu0 %v273
    %301 = vmatpush.msra.mxu0 %v272
    %302 = vmatpush.msra.mxu0 %v271
    %303 = vmatpush.msra.mxu0 %v270
    %304 = vmatpush.msra.mxu0 %v269
    %305 = vmatmul.f32.gmra.mxu0 %v268
    %v306 = vpop.f32.mrf.mxu0
    %v307 = vadd.f32 %v287, %v306
    %308 = vdwg.mxu0
    %vm309 = vcmask 74752
    %310 = vst.msk [vmem:[#allocation7] sm:$0x3] %vm309, %v307
    %v311 = vld [vmem:[%s1] sm:$0x3f]
    %v312 = vld [vmem:[#allocation2] sm:$0xff]
    %v313 = vld [vmem:[#allocation2 + $0x8] sm:$0xff]
    %v314 = vld [vmem:[#allocation2 + $0x10] sm:$0xff]
    %v315 = vld [vmem:[#allocation2 + $0x18] sm:$0xff]
    %v316 = vld [vmem:[#allocation2 + $0x20] sm:$0xff]
    %v317 = vld [vmem:[#allocation2 + $0x28] sm:$0xff]
    %v318 = vld [vmem:[#allocation2 + $0x30] sm:$0xff]
    %v319 = vld [vmem:[#allocation2 + $0x38] sm:$0xff]
    %v320 = vld [vmem:[#allocation2 + $0x40] sm:$0xff]
    %v321 = vld [vmem:[#allocation2 + $0x48] sm:$0xff]
    %v322 = vld [vmem:[#allocation2 + $0x50] sm:$0xff]
    %v323 = vld [vmem:[#allocation2 + $0x58] sm:$0xff]
    %v324 = vld [vmem:[#allocation2 + $0x60] sm:$0xff]
    %v325 = vld [vmem:[#allocation2 + $0x68] sm:$0xff]
    %v326 = vld [vmem:[#allocation2 + $0x70] sm:$0xff]
    %v327 = vld [vmem:[#allocation2 + $0x78] sm:$0xff]
    %v328 = vld [vmem:[#allocation2 + $0x80] sm:$0xff]
    %v329 = vld [vmem:[#allocation2 + $0x88] sm:$0xff]
    %v330 = vld [vmem:[#allocation2 + $0x90] sm:$0xff]
    %v331 = vld [vmem:[#allocation2 + $0x98] sm:$0xff]
    %v332 = vld [vmem:[#allocation2 + $0xa0] sm:$0xff]
    %v333 = vld [vmem:[#allocation2 + $0xa8] sm:$0xff]
    %v334 = vld [vmem:[#allocation2 + $0xb0] sm:$0xff]
    %v335 = vld [vmem:[#allocation2 + $0xb8] sm:$0xff]
    %v336 = vld [vmem:[#allocation2 + $0xc0] sm:$0xff]
    %v337 = vld [vmem:[#allocation2 + $0xc8] sm:$0xff]
    %v338 = vld [vmem:[#allocation2 + $0xd0] sm:$0xff]
    %v339 = vld [vmem:[#allocation2 + $0xd8] sm:$0xff]
    %v340 = vld [vmem:[#allocation2 + $0xe0] sm:$0xff]
    %v341 = vld [vmem:[#allocation2 + $0xe8] sm:$0xff]
    %v342 = vld [vmem:[#allocation2 + $0xf0] sm:$0xff]
    %v343 = vld [vmem:[#allocation2 + $0xf8] sm:$0xff]
    %v344 = vld [vmem:[#allocation2 + $0x100] sm:$0xff]
    %v345 = vld [vmem:[#allocation2 + $0x108] sm:$0xff]
    %v346 = vld [vmem:[#allocation2 + $0x110] sm:$0xff]
    %v347 = vld [vmem:[#allocation2 + $0x118] sm:$0xff]
    %v348 = vld [vmem:[#allocation2 + $0x120] sm:$0xff]
    %v349 = vld [vmem:[#allocation2 + $0x128] sm:$0xff]
    %v350 = vld [vmem:[#allocation2 + $0x130] sm:$0xff]
    %v351 = vld [vmem:[#allocation2 + $0x138] sm:$0xff]
    %v352 = vld [vmem:[%s3] sm:$0x1]
    %v354 = vperm.slane %v352, 0
    %357 = vst [vmem:[#allocation1] ss:$4 sm:$0xff] %v311
    %v358 = vld.sshfl [vmem:[#allocation1] sm:$0xff pattern:$0x73625140]
    %v359 = vld.sshfl [vmem:[#allocation1 + $0x8] sm:$0xff pattern:$0x73625140]
    %v360 = vld.sshfl [vmem:[#allocation1 + $0x10] sm:$0xff pattern:$0x73625140]
    %v363 = vsel %vm123, %v360, 0
    %365 = vmatpush.msra.mxu0 %v327
    %366 = vmatpush.msra.mxu0 %v326
    %367 = vmatpush.msra.mxu0 %v325
    %368 = vmatpush.msra.mxu0 %v324
    %369 = vmatpush.msra.mxu0 %v323
    %370 = vmatpush.msra.mxu0 %v322
    %371 = vmatpush.msra.mxu0 %v321
    %372 = vmatpush.msra.mxu0 %v320
    %373 = vmatpush.msra.mxu0 %v319
    %374 = vmatpush.msra.mxu0 %v318
    %375 = vmatpush.msra.mxu0 %v317
    %376 = vmatpush.msra.mxu0 %v316
    %377 = vmatpush.msra.mxu0 %v315
    %378 = vmatpush.msra.mxu0 %v314
    %379 = vmatpush.msra.mxu0 %v313
    %380 = vmatpush.msra.mxu0 %v312
    %381 = vmatmul.f32.gmra.mxu0 %v358
    %v382 = vpop.f32.mrf.mxu0
    %v383 = vadd.f32 %v354, %v382
    %384 = vdwg.mxu0
    %385 = vmatpush.msra.mxu0 %v343
    %386 = vmatpush.msra.mxu0 %v342
    %387 = vmatpush.msra.mxu0 %v341
    %388 = vmatpush.msra.mxu0 %v340
    %389 = vmatpush.msra.mxu0 %v339
    %390 = vmatpush.msra.mxu0 %v338
    %391 = vmatpush.msra.mxu0 %v337
    %392 = vmatpush.msra.mxu0 %v336
    %393 = vmatpush.msra.mxu0 %v335
    %394 = vmatpush.msra.mxu0 %v334
    %395 = vmatpush.msra.mxu0 %v333
    %396 = vmatpush.msra.mxu0 %v332
    %397 = vmatpush.msra.mxu0 %v331
    %398 = vmatpush.msra.mxu0 %v330
    %399 = vmatpush.msra.mxu0 %v329
    %400 = vmatpush.msra.mxu0 %v328
    %401 = vmatmul.f32.gmra.mxu0 %v359
    %v402 = vpop.f32.mrf.mxu0
    %v403 = vadd.f32 %v383, %v402
    %404 = vdwg.mxu0
    %405 = vmatpush.msra.mxu0 0.0
    %406 = vmatpush.msra.mxu0 0.0
    %407 = vmatpush.msra.mxu0 0.0
    %408 = vmatpush.msra.mxu0 0.0
    %409 = vmatpush.msra.mxu0 0.0
    %410 = vmatpush.msra.mxu0 0.0
    %411 = vmatpush.msra.mxu0 0.0
    %412 = vmatpush.msra.mxu0 0.0
    %413 = vmatpush.msra.mxu0 %v351
    %414 = vmatpush.msra.mxu0 %v350
    %415 = vmatpush.msra.mxu0 %v349
    %416 = vmatpush.msra.mxu0 %v348
    %417 = vmatpush.msra.mxu0 %v347
    %418 = vmatpush.msra.mxu0 %v346
    %419 = vmatpush.msra.mxu0 %v345
    %420 = vmatpush.msra.mxu0 %v344
    %421 = vmatmul.f32.gmra.mxu0 %v363
    %v422 = vpop.f32.mrf.mxu0
    %v423 = vadd.f32 %v403, %v422
    %424 = vdwg.mxu0
    %v425 = vmax.f32 %v423, 0.0
    %v426 = vld [vmem:[%s4] sm:$0xff]
    %v427 = vld [vmem:[%s4 + $0x8] sm:$0xff]
    %v428 = vld [vmem:[%s4 + $0x10] sm:$0xff]
    %v429 = vld [vmem:[%s4 + $0x18] sm:$0xff]
    %v430 = vld [vmem:[%s4 + $0x20] sm:$0xff]
    %v431 = vld [vmem:[%s4 + $0x28] sm:$0xff]
    %v432 = vld [vmem:[%s4 + $0x30] sm:$0xff]
    %v433 = vld [vmem:[%s4 + $0x38] sm:$0xff]
    %v434 = vld [vmem:[%s4 + $0x40] sm:$0xff]
    %v435 = vld [vmem:[%s4 + $0x48] sm:$0xff]
    %v436 = vld [vmem:[%s4 + $0x50] sm:$0xff]
    %v437 = vld [vmem:[%s4 + $0x58] sm:$0xff]
    %v438 = vld [vmem:[%s4 + $0x60] sm:$0xff]
    %v439 = vld [vmem:[%s4 + $0x68] sm:$0xff]
    %v440 = vld [vmem:[%s4 + $0x70] sm:$0xff]
    %v441 = vld [vmem:[%s4 + $0x78] sm:$0xff]
    %v442 = vld [vmem:[%s5] sm:$0x1]
    %v444 = vperm.slane %v442, 0
    %446 = vmatpush.msra.mxu0 %v441
    %447 = vmatpush.msra.mxu0 %v440
    %448 = vmatpush.msra.mxu0 %v439
    %449 = vmatpush.msra.mxu0 %v438
    %450 = vmatpush.msra.mxu0 %v437
    %451 = vmatpush.msra.mxu0 %v436
    %452 = vmatpush.msra.mxu0 %v435
    %453 = vmatpush.msra.mxu0 %v434
    %454 = vmatpush.msra.mxu0 %v433
    %455 = vmatpush.msra.mxu0 %v432
    %456 = vmatpush.msra.mxu0 %v431
    %457 = vmatpush.msra.mxu0 %v430
    %458 = vmatpush.msra.mxu0 %v429
    %459 = vmatpush.msra.mxu0 %v428
    %460 = vmatpush.msra.mxu0 %v427
    %461 = vmatpush.msra.mxu0 %v426
    %462 = vmatmul.f32.gmra.mxu0 %v425
    %v463 = vpop.f32.mrf.mxu0
    %v464 = vadd.f32 %v444, %v463
    %465 = vdwg.mxu0
    %v466 = vmax.f32 %v464, 0.0
    %v467 = vld [vmem:[#allocation5] sm:$0xff]
    %v468 = vld [vmem:[#allocation5 + $0x8] sm:$0xff]
    %v469 = vld [vmem:[#allocation5 + $0x10] sm:$0xff]
    %v470 = vld [vmem:[#allocation5 + $0x18] sm:$0xff]
    %v471 = vld [vmem:[#allocation5 + $0x20] sm:$0xff]
    %v472 = vld [vmem:[#allocation5 + $0x28] sm:$0xff]
    %v473 = vld [vmem:[#allocation5 + $0x30] sm:$0xff]
    %v474 = vld [vmem:[#allocation5 + $0x38] sm:$0xff]
    %v475 = vld [vmem:[#allocation5 + $0x40] sm:$0xff]
    %v476 = vld [vmem:[#allocation5 + $0x48] sm:$0xff]
    %v477 = vld [vmem:[#allocation5 + $0x50] sm:$0xff]
    %v478 = vld [vmem:[#allocation5 + $0x58] sm:$0xff]
    %v479 = vld [vmem:[#allocation5 + $0x60] sm:$0xff]
    %v480 = vld [vmem:[#allocation5 + $0x68] sm:$0xff]
    %v481 = vld [vmem:[#allocation5 + $0x70] sm:$0xff]
    %v482 = vld [vmem:[#allocation5 + $0x78] sm:$0xff]
    %v483 = vld [vmem:[%s7] sm:$0x1]
    %v485 = vperm.slane %v483, 0
    %487 = vmatpush.msra.mxu0 %v482
    %488 = vmatpush.msra.mxu0 %v481
    %489 = vmatpush.msra.mxu0 %v480
    %490 = vmatpush.msra.mxu0 %v479
    %491 = vmatpush.msra.mxu0 %v478
    %492 = vmatpush.msra.mxu0 %v477
    %493 = vmatpush.msra.mxu0 %v476
    %494 = vmatpush.msra.mxu0 %v475
    %495 = vmatpush.msra.mxu0 %v474
    %496 = vmatpush.msra.mxu0 %v473
    %497 = vmatpush.msra.mxu0 %v472
    %498 = vmatpush.msra.mxu0 %v471
    %499 = vmatpush.msra.mxu0 %v470
    %500 = vmatpush.msra.mxu0 %v469
    %501 = vmatpush.msra.mxu0 %v468
    %502 = vmatpush.msra.mxu0 %v467
    %503 = vmatmul.f32.gmra.mxu0 %v466
    %v504 = vpop.f32.mrf.mxu0
    %v505 = vadd.f32 %v485, %v504
    %506 = vdwg.mxu0
    %v507 = vmax.f32 %v505, 0.0
    %v508 = vld [vmem:[%s8] sm:$0xff]
    %v509 = vld [vmem:[%s8 + $0x8] sm:$0xff]
    %v510 = vld [vmem:[%s8 + $0x10] sm:$0xff]
    %v511 = vld [vmem:[%s8 + $0x18] sm:$0xff]
    %v512 = vld [vmem:[%s8 + $0x20] sm:$0xff]
    %v513 = vld [vmem:[%s8 + $0x28] sm:$0xff]
    %v514 = vld [vmem:[%s8 + $0x30] sm:$0xff]
    %v515 = vld [vmem:[%s8 + $0x38] sm:$0xff]
    %v516 = vld [vmem:[%s8 + $0x40] sm:$0xff]
    %v517 = vld [vmem:[%s8 + $0x48] sm:$0xff]
    %v518 = vld [vmem:[%s8 + $0x50] sm:$0xff]
    %v519 = vld [vmem:[%s8 + $0x58] sm:$0xff]
    %v520 = vld [vmem:[%s8 + $0x60] sm:$0xff]
    %v521 = vld [vmem:[%s8 + $0x68] sm:$0xff]
    %v522 = vld [vmem:[%s8 + $0x70] sm:$0xff]
    %v523 = vld [vmem:[%s8 + $0x78] sm:$0xff]
    %v524 = vld [vmem:[%s9] sm:$0x1]
    %v526 = vperm.slane %v524, 0
    %528 = vmatpush.msra.mxu0 %v523
    %529 = vmatpush.msra.mxu0 %v522
    %530 = vmatpush.msra.mxu0 %v521
    %531 = vmatpush.msra.mxu0 %v520
    %532 = vmatpush.msra.mxu0 %v519
    %533 = vmatpush.msra.mxu0 %v518
    %534 = vmatpush.msra.mxu0 %v517
    %535 = vmatpush.msra.mxu0 %v516
    %536 = vmatpush.msra.mxu0 %v515
    %537 = vmatpush.msra.mxu0 %v514
    %538 = vmatpush.msra.mxu0 %v513
    %539 = vmatpush.msra.mxu0 %v512
    %540 = vmatpush.msra.mxu0 %v511
    %541 = vmatpush.msra.mxu0 %v510
    %542 = vmatpush.msra.mxu0 %v509
    %543 = vmatpush.msra.mxu0 %v508
    %544 = vmatmul.f32.gmra.mxu0 %v507
    %v545 = vpop.f32.mrf.mxu0
    %v546 = vadd.f32 %v526, %v545
    %547 = vdwg.mxu0
    %548 = vst.msk [vmem:[#allocation8] sm:$0x3] %vm309, %v546
    // Predicated region
    $region50: #{tpu_custom_call.1} parent=1 // pred_check
      _
    $region51: #{tpu_custom_call.1} parent=1 // pred_check_branch
      %550 = sbr.rel (0) target = $region53
    $region52: #{tpu_custom_call.1} parent=1 // pred_region
      %552 = vsyncadd [#allocation4], 0
      %s554 = sshll.u32 [#allocation7], 4
      %s555 = int_to_ptr.vmem [resolvable:$true] %s554
      %s556 = sshll.u32 %s10, 4
      %s557 = int_to_ptr.hbm [resolvable:$true] %s556
      %559 = dma.vmem_to_hbm [thread:$0]  %s555, 32, %s557, [#allocation4]
    $region53: #{tpu_custom_call.1} parent=1 // pred_fallthru
      _
    // Predicated region
    $region54: #{tpu_custom_call.1} parent=1 // pred_check
      _
    $region55: #{tpu_custom_call.1} parent=1 // pred_check_branch
      %561 = sbr.rel (0) target = $region57
    $region56: #{tpu_custom_call.1} parent=1 // pred_region
      %563 = vsyncadd [#allocation9], 0
      %s565 = sshll.u32 [#allocation8], 4
      %s566 = int_to_ptr.vmem [resolvable:$true] %s565
      %s567 = sshll.u32 %s11, 4
      %s568 = int_to_ptr.hbm [resolvable:$true] %s567
      %570 = dma.vmem_to_hbm [thread:$0]  %s566, 32, %s568, [#allocation9]
    $region57: #{tpu_custom_call.1} parent=1 // pred_fallthru
      _
    // Predicated region
    $region58: #{tpu_custom_call.1} parent=1 // pred_check
      _
    $region59: #{tpu_custom_call.1} parent=1 // pred_check_branch
      %572 = sbr.rel (0) target = $region61
    $region60: #{tpu_custom_call.1} parent=1 // pred_region
      %574 = dma.done [#allocation4], 32
    $region61: #{tpu_custom_call.1} parent=1 // pred_fallthru
      _
    // Predicated region
    $region62: #{tpu_custom_call.1} parent=1 // pred_check
      _
    $region63: #{tpu_custom_call.1} parent=1 // pred_check_branch
      %576 = sbr.rel (0) target = $region65
    $region64: #{tpu_custom_call.1} parent=1 // pred_region
      %578 = dma.done [#allocation9], 32
    $region65: #{tpu_custom_call.1} parent=1 // pred_fallthru
      _
    %579 = vsyncpa [#allocation3], 1
    %580 = vsyncpa [#allocation6], 1
    %581 = vsyncpa [#allocation4], 1
    %582 = vsyncpa [#allocation9], 1

</llo_original>
